<compile_context>
chip_gen: v5e
topology: v5e:2x2
jax: 0.10.0
libtpu: 0.0.40
codegen_flags: <defaults>
</compile_context>

<pallas_src>
import jax
import jax.numpy as jnp
from jax.experimental import pallas as pl
from jax.experimental.pallas import tpu as pltpu


_LANE = 128
_LANE_TILE_CAP = 2048               # lane tile width cap (multiple of 128)
_TILE_BYTES_CAP = 2 * 1024 * 1024   # per-tile VMEM budget (x4 when double-buffered in+out)


def _copy_kernel(x_ref, o_ref):
    # Straight lane-dense tile copy; the flatten already happened (for free)
    # in the wrapper's reshape.
    o_ref[...] = x_ref[...]


def _sublane_unit(dtype):
    """Packed sublane tile height: 8 for 32-bit, 16 for 16-bit, 32 for 8-bit."""
    return max(8, 32 // jnp.dtype(dtype).itemsize)


def _lane_slab_width(total):
    """Largest multiple of 128 that divides `total`, capped at _LANE_TILE_CAP.

    Returns 0 if no such width exists (then we fall back to (N, flat) tiling).
    """
    best = 0
    w = _LANE
    cap = min(total, _LANE_TILE_CAP)
    while w <= cap:
        if total % w == 0:
            best = w
        w += _LANE
    return best


def _lane_tile(dim):
    """Lane tile: multiple of 128 capped, or the full dim when dim < 128."""
    if dim <= _LANE:
        return dim                       # full-extent block (legal, small)
    return min((dim // _LANE) * _LANE, _LANE_TILE_CAP)


def _row_tile(rows, width, itemsize, unit):
    """Sublane tile height: multiple of `unit` (or full `rows` when rows <= unit),
    capped so one tile stays under _TILE_BYTES_CAP."""
    if rows <= unit:
        return rows                      # full-extent block (legal, small)
    cap = max(unit, (_TILE_BYTES_CAP // (width * itemsize)) // unit * unit)
    return min((rows // unit) * unit, cap)


def flatten_layer(x, materialize=True):
    """Pallas equivalent of FlattenLayer.forward: x.view(N, -1)."""
    n = x.shape[0]
    flat = 1
    for d in x.shape[1:]:
        flat *= d

    # Metadata-only row-major flatten (== x.view(N, -1) for a contiguous array).
    x2 = x.reshape(n, flat)
    if not materialize:
        # Production path: the flatten is free — zero HBM traffic.
        return x2

    itemsize = jnp.dtype(x.dtype).itemsize
    unit = _sublane_unit(x.dtype)
    total = n * flat

    w = _lane_slab_width(total)
    if w:
        # Shape-agnostic lane-dense slab copy: view the whole contiguous buffer
        # as (rows, W) with W | total and W % 128 == 0 (full lanes, unmasked
        # stores regardless of the batch shape), copy, reshape back for free.
        rows = total // w
        src = x.reshape(rows, w)
        tb = _row_tile(rows, w, itemsize, unit)
        grid = (pl.cdiv(rows, tb),)
        in_specs = [pl.BlockSpec((tb, w), lambda i: (i, 0))]
        out_specs = pl.BlockSpec((tb, w), lambda i: (i, 0))
        out_shape = jax.ShapeDtypeStruct((rows, w), x.dtype)
        dims = ("parallel",)
    else:
        # Fallback when total has no multiple-of-128 factor: tile the (N, flat)
        # view directly.  Tiles stay capped (no full-dim blowup); ragged tails
        # are masked by Pallas.
        src = x2
        tf = _lane_tile(flat)
        tb = _row_tile(n, tf, itemsize, unit)
        grid = (pl.cdiv(n, tb), pl.cdiv(flat, tf))
        in_specs = [pl.BlockSpec((tb, tf), lambda i, j: (i, j))]
        out_specs = pl.BlockSpec((tb, tf), lambda i, j: (i, j))
        out_shape = jax.ShapeDtypeStruct((n, flat), x.dtype)
        dims = ("parallel", "parallel")

    cost = pl.CostEstimate(
        flops=0,
        transcendentals=0,
        bytes_accessed=2 * total * itemsize,
    )

    out = pl.pallas_call(
        _copy_kernel,
        out_shape=out_shape,
        grid_spec=pltpu.PrefetchScalarGridSpec(
            num_scalar_prefetch=0,
            grid=grid,
            in_specs=in_specs,
            out_specs=out_specs,
        ),
        compiler_params=pltpu.CompilerParams(dimension_semantics=dims),
        cost_estimate=cost,
    )(src)

    # Metadata-only reshape back to the (N, -1) view the module returns.
    return out.reshape(n, flat)


if __name__ == "__main__":
    key = jax.random.PRNGKey(0)
    # NCHW, small shapes: batch=2, channels=4, spatial=16x16
    x = jax.random.normal(key, (2, 4, 16, 16), dtype=jnp.float32)

    out = flatten_layer(x)
    out = jax.block_until_ready(out)

    # Verify against the reference semantics of x.view(N, -1)
    ref = x.reshape(x.shape[0], -1)
    assert out.shape == (2, 4 * 16 * 16), out.shape
    assert out.dtype == x.dtype
    assert jnp.array_equal(out, ref), "mismatch vs reference flatten"

    # Zero-copy (production) path must also match.
    out_nocopy = jax.block_until_ready(flatten_layer(x, materialize=False))
    assert jnp.array_equal(out_nocopy, ref)

    print("KERNEL_OK")
</pallas_src>

<mosaic_0001>
module attributes {stable_mosaic.version = 11 : i64} {
  func.func @_copy_kernel(%arg0: i32, %arg1: memref<1x2048xf32, #tpu.memory_space<vmem>>, %arg2: memref<1x2048xf32, #tpu.memory_space<vmem>>) attributes {dimension_semantics = [#tpu.dimension_semantics<parallel>], iteration_bounds = array<i64: 1>, scalar_prefetch = 0 : i64, scratch_operands = 0 : i64, tpu.core_type = #tpu.core_type<tc>, window_params = [{transform_indices = @transform_0, window_bounds = array<i64: 1, 2048>}, {transform_indices = @transform_1, window_bounds = array<i64: 1, 2048>}]} {
    %c0 = arith.constant 0 : index
    %c0_0 = arith.constant 0 : index
    %0 = vector.load %arg1[%c0, %c0_0] : memref<1x2048xf32, #tpu.memory_space<vmem>>, vector<1x2048xf32>
    %c0_1 = arith.constant 0 : index
    %c0_2 = arith.constant 0 : index
    %1 = vector.load %arg2[%c0_1, %c0_2] : memref<1x2048xf32, #tpu.memory_space<vmem>>, vector<1x2048xf32>
    tpu.vector_store %arg2[%c0_1, %c0_2], %0 {strides = array<i32>} : memref<1x2048xf32, #tpu.memory_space<vmem>>, vector<1x2048xf32>,
    return
  }
  func.func @transform_0(%arg0: i32) -> (i32, i32) {
    %c0_i32 = arith.constant 0 : i32
    %c0_i32_0 = arith.constant 0 : i32
    return %arg0, %c0_i32 : i32, i32
  }
  func.func @transform_1(%arg0: i32) -> (i32, i32) {
    %c0_i32 = arith.constant 0 : i32
    %c0_i32_0 = arith.constant 0 : i32
    return %arg0, %c0_i32 : i32, i32
  }
}

</mosaic_0001>

<llo_original>
// kernel: tpu_custom_call.1
$region0: #{tpu_custom_call.1}
  #allocation0 [shape = 'u32[]', space=smem, size = 0x4, offset = 0x4, fixed_abs, tag = 'smem constant byte address 0x4 - core index']
  #allocation1 [shape = 'u32[72,128]{1,0:T(1,128)}', space=vmem, size = 0x9000, scoped, tag = 'internal scratch']
  %s0 = inlined_call_operand.hbm [shape: f32[1,2048], index: 0, kind: input, shape index: {}]
  %s1 = inlined_call_operand.hbm [shape: f32[1,2048], index: 1, kind: output, shape index: {}]
  %s2 = sld [smem:[#allocation0]]
  $region18: #{tpu_custom_call.1} parent=0
    _
  %s4 = ssub.s32 1, %s2
  %s5 = scalar_select 0, %s4, %s2
  $region1: #{tpu_custom_call.1} parent=0
    #allocation2 [shape = 'u8[8192]{0}', space=vmem, size = 0x2000, scoped, tag = 'input window, operand 0, single buffered']
    #allocation3 [shape = 's32[1]{0}', space=sflag, size = 0x4, scoped, tag = 'scoped memory for tpu_custom_call.1']
    #allocation4 [shape = 's32[1]{0}', space=sflag, size = 0x4, scoped, tag = 'scoped memory for tpu_custom_call.1']
    #allocation5 [shape = 'u8[8192]{0}', space=vmem, size = 0x2000, scoped, tag = 'output window, operand 0, single buffered']
    %6 = vsyncpa [#allocation3], 0
    %7 = vsyncpa [#allocation4], 0
    // Predicated region
    $region2: #{tpu_custom_call.1} parent=1 // pred_check
      _
    $region3: #{tpu_custom_call.1} parent=1 // pred_check_branch
      %9 = sbr.rel (0) target = $region5
    $region4: #{tpu_custom_call.1} parent=1 // pred_region
      %11 = vsyncadd [#allocation3], 0
      %s13 = sshll.u32 %s0, 4
      %s14 = int_to_ptr.hbm [resolvable:$true] %s13
      %s15 = sshll.u32 [#allocation2], 4
      %s16 = int_to_ptr.vmem [resolvable:$true] %s15
      %18 = dma.hbm_to_vmem [thread:$0]  %s14, 256, %s16, [#allocation3]
    $region5: #{tpu_custom_call.1} parent=1 // pred_fallthru
      _
    // Predicated region
    $region6: #{tpu_custom_call.1} parent=1 // pred_check
      _
    $region7: #{tpu_custom_call.1} parent=1 // pred_check_branch
      %20 = sbr.rel (0) target = $region9
    $region8: #{tpu_custom_call.1} parent=1 // pred_region
      %22 = dma.done [#allocation3], 256
    $region9: #{tpu_custom_call.1} parent=1 // pred_fallthru
      _
    %v23 = vld [vmem:[#allocation2] sm:$0xff]
    %v24 = vld [vmem:[#allocation2 + $0x8] sm:$0xff]
    %25 = vst [vmem:[#allocation5] sm:$0xff] %v23
    %26 = vst [vmem:[#allocation5 + $0x8] sm:$0xff] %v24
    // Predicated region
    $region10: #{tpu_custom_call.1} parent=1 // pred_check
      _
    $region11: #{tpu_custom_call.1} parent=1 // pred_check_branch
      %28 = sbr.rel (0) target = $region13
    $region12: #{tpu_custom_call.1} parent=1 // pred_region
      %30 = vsyncadd [#allocation4], 0
      %s32 = sshll.u32 [#allocation5], 4
      %s33 = int_to_ptr.vmem [resolvable:$true] %s32
      %s34 = sshll.u32 %s1, 4
      %s35 = int_to_ptr.hbm [resolvable:$true] %s34
      %37 = dma.vmem_to_hbm [thread:$0]  %s33, 256, %s35, [#allocation4]
    $region13: #{tpu_custom_call.1} parent=1 // pred_fallthru
      _
    // Predicated region
    $region14: #{tpu_custom_call.1} parent=1 // pred_check
      _
    $region15: #{tpu_custom_call.1} parent=1 // pred_check_branch
      %39 = sbr.rel (0) target = $region17
    $region16: #{tpu_custom_call.1} parent=1 // pred_region
      %41 = dma.done [#allocation4], 256
    $region17: #{tpu_custom_call.1} parent=1 // pred_fallthru
      _
    %42 = vsyncpa [#allocation3], 1
    %43 = vsyncpa [#allocation4], 1

</llo_original>
